<compile_context>
chip_gen: v5e
topology: v5e:2x2
jax: 0.10.0
libtpu: 0.0.40
codegen_flags: <defaults>
</compile_context>

<pallas_src>
import functools

import jax
import jax.numpy as jnp
from jax.experimental import pallas as pl
from jax.experimental.pallas import tpu as pltpu


def _round_up(x, m):
    return (x + m - 1) // m * m


def _mxu_tile():
    try:
        kind = jax.devices()[0].device_kind.lower()
    except Exception:
        kind = ""
    return 256 if ("v6" in kind or "v7" in kind) else 128


_T = _mxu_tile()          # preferred matmul tile (256 on v6e/v7x, else 128)


def _apply_act(y, act, alpha):
    if act == "relu":
        return jnp.maximum(y, 0.0)
    if act == "prelu":
        return jnp.where(y >= 0.0, y, alpha * y)
    if act == "sigmoid":
        return jax.nn.sigmoid(y)
    return y


# ---------------------------------------------------------------------------
# Pallas kernels
# ---------------------------------------------------------------------------
def _mm_kernel(a_ref, b_ref, s_ref, c_ref, o_ref, acc_ref, *, act, alpha):
    k = pl.program_id(2)

    @pl.when(k == 0)
    def _():
        acc_ref[...] = jnp.zeros_like(acc_ref)

    acc_ref[...] += jnp.dot(a_ref[...], b_ref[...],
                            preferred_element_type=jnp.float32)

    @pl.when(k == pl.num_programs(2) - 1)
    def _():
        y = acc_ref[...] * s_ref[...] + c_ref[...]
        o_ref[...] = _apply_act(y, act, alpha).astype(o_ref.dtype)


def _mm_res_kernel(a_ref, b_ref, s_ref, c_ref, r_ref, o_ref, acc_ref, *,
                   act, alpha):
    k = pl.program_id(2)

    @pl.when(k == 0)
    def _():
        acc_ref[...] = jnp.zeros_like(acc_ref)

    acc_ref[...] += jnp.dot(a_ref[...], b_ref[...],
                            preferred_element_type=jnp.float32)

    @pl.when(k == pl.num_programs(2) - 1)
    def _():
        y = acc_ref[...] * s_ref[...] + c_ref[...] \
            + r_ref[...].astype(jnp.float32)
        o_ref[...] = _apply_act(y, act, alpha).astype(o_ref.dtype)


def _conv_s1_kernel(a_ref, w_ref, s_ref, c_ref, o_ref, acc_ref, *,
                    offsets, m_out, act, alpha):
    """Implicit im2col: a_ref is the flat padded image (rows, TCin); each of
    the kh*kw taps is a statically shifted row window matmul'ed with its own
    (TCin, TCout) weight slice and accumulated in fp32."""
    ci = pl.program_id(1)

    @pl.when(ci == 0)
    def _():
        acc_ref[...] = jnp.zeros_like(acc_ref)

    part = None
    for kk, off in enumerate(offsets):
        d = jnp.dot(a_ref[off:off + m_out, :], w_ref[kk],
                    preferred_element_type=jnp.float32)
        part = d if part is None else part + d
    acc_ref[...] += part

    @pl.when(ci == pl.num_programs(1) - 1)
    def _():
        y = acc_ref[...] * s_ref[...] + c_ref[...]
        o_ref[...] = _apply_act(y, act, alpha).astype(o_ref.dtype)


def _maxpool_kernel(s00, s01, s10, s11, o_ref, *, oh, ow):
    # s_ab[y, x] = xpad[2y+a, 2x+b]; 3x3/stride-2 window = 9 shifted terms.
    m = jnp.maximum
    r = s00[:, 0:oh, 0:ow, :]
    r = m(r, s00[:, 0:oh, 1:ow + 1, :])
    r = m(r, s00[:, 1:oh + 1, 0:ow, :])
    r = m(r, s00[:, 1:oh + 1, 1:ow + 1, :])
    r = m(r, s01[:, 0:oh, 0:ow, :])
    r = m(r, s01[:, 1:oh + 1, 0:ow, :])
    r = m(r, s10[:, 0:oh, 0:ow, :])
    r = m(r, s10[:, 0:oh, 1:ow + 1, :])
    r = m(r, s11[:, 0:oh, 0:ow, :])
    o_ref[...] = r


# ---------------------------------------------------------------------------
# Wrappers
# ---------------------------------------------------------------------------
def matmul_bn_act(A, W, scale, bias, *, act="none", alpha=0.25, residual=None):
    """(M,K) @ (K,N) with fused scale/bias/residual/activation.  bf16 operands,
    fp32 accumulation, bf16 output."""
    A = A.astype(jnp.bfloat16)
    W = W.astype(jnp.bfloat16)
    M, K = A.shape
    _, N = W.shape

    # Adaptive tiles: no 128-padding of tiny M / N / K dims.
    tm = min(_T, _round_up(M, 8))
    Mp = _round_up(M, tm)
    if N >= 128:
        Np = _round_up(N, 128)
        tn = _T if Np % _T == 0 else 128
    else:
        Np, tn = N, N                       # full-extent lane block
    if K % 128 == 0:
        tk = _T if K % _T == 0 else 128
    else:
        tk = K                              # full-extent K block (e.g. 147)

    A_p = jnp.pad(A, ((0, Mp - M), (0, 0))) if Mp != M else A
    W_p = jnp.pad(W, ((0, 0), (0, Np - N))) if Np != N else W
    s_p = jnp.pad(scale.reshape(1, N).astype(jnp.float32),
                  ((0, 0), (0, Np - N)))
    b_p = jnp.pad(bias.reshape(1, N).astype(jnp.float32),
                  ((0, 0), (0, Np - N)))

    grid = (Mp // tm, Np // tn, K // tk)
    a_spec = pl.BlockSpec((tm, tk), lambda i, j, k: (i, k))
    b_spec = pl.BlockSpec((tk, tn), lambda i, j, k: (k, j))
    v_spec = pl.BlockSpec((1, tn), lambda i, j, k: (0, j))
    o_spec = pl.BlockSpec((tm, tn), lambda i, j, k: (i, j))

    if residual is None:
        kern = functools.partial(_mm_kernel, act=act, alpha=alpha)
        in_specs = [a_spec, b_spec, v_spec, v_spec]
        args = (A_p, W_p, s_p, b_p)
    else:
        r_p = residual.astype(jnp.bfloat16)
        if Mp != M or Np != N:
            r_p = jnp.pad(r_p, ((0, Mp - M), (0, Np - N)))
        kern = functools.partial(_mm_res_kernel, act=act, alpha=alpha)
        in_specs = [a_spec, b_spec, v_spec, v_spec, o_spec]
        args = (A_p, W_p, s_p, b_p, r_p)

    out = pl.pallas_call(
        kern,
        out_shape=jax.ShapeDtypeStruct((Mp, Np), jnp.bfloat16),
        grid_spec=pltpu.PrefetchScalarGridSpec(
            num_scalar_prefetch=0,
            grid=grid,
            in_specs=in_specs,
            out_specs=o_spec,
            scratch_shapes=[pltpu.VMEM((tm, tn), jnp.float32)],
        ),
        compiler_params=pltpu.CompilerParams(
            dimension_semantics=("parallel", "parallel", "arbitrary")),
    )(*args)
    if Mp != M or Np != N:
        out = out[:M, :N]
    return out


def _conv2d_s1_implicit(x, p, padding, act, alpha):
    """Stride-1 KxK conv without materializing im2col in HBM."""
    n, h, w_, cin = x.shape
    kh, kw, _, cout = p["w"].shape
    hp, wp = h + 2 * padding, w_ + 2 * padding
    oh, ow = hp - kh + 1, wp - kw + 1
    halo = (kh - 1) * wp + (kw - 1)
    m_in = n * hp * wp
    m_out = m_in - halo                       # last needed base row + 1

    tci = cin if cin <= 256 else 256
    tco = cout if cout <= 256 else 256
    if cin % tci or cout % tco:
        return None
    # VMEM budget (double-buffered bf16 inputs + f32 accumulator).
    vmem = 2 * (m_in * tci * 2 + kh * kw * tci * tco * 2 + m_out * tco * 2) \
        + m_out * tco * 4
    if vmem > 10 * 1024 * 1024:
        return None                           # caller falls back to im2col

    xp = jnp.pad(x, ((0, 0), (padding, padding), (padding, padding), (0, 0)))
    A = xp.reshape(m_in, cin).astype(jnp.bfloat16)        # free reshape
    Wm = p["w"].reshape(kh * kw, cin, cout).astype(jnp.bfloat16)
    s2 = p["scale"].reshape(1, cout).astype(jnp.float32)
    b2 = p["bias"].reshape(1, cout).astype(jnp.float32)
    offs = tuple(i * wp + j for i in range(kh) for j in range(kw))

    out = pl.pallas_call(
        functools.partial(_conv_s1_kernel, offsets=offs, m_out=m_out,
                          act=act, alpha=alpha),
        out_shape=jax.ShapeDtypeStruct((m_out, cout), jnp.bfloat16),
        grid_spec=pltpu.PrefetchScalarGridSpec(
            num_scalar_prefetch=0,
            grid=(cout // tco, cin // tci),
            in_specs=[
                pl.BlockSpec((m_in, tci), lambda co, ci: (0, ci)),
                pl.BlockSpec((kh * kw, tci, tco), lambda co, ci: (0, ci, co)),
                pl.BlockSpec((1, tco), lambda co, ci: (0, co)),
                pl.BlockSpec((1, tco), lambda co, ci: (0, co)),
            ],
            out_specs=pl.BlockSpec((m_out, tco), lambda co, ci: (0, co)),
            scratch_shapes=[pltpu.VMEM((m_out, tco), jnp.float32)],
        ),
        compiler_params=pltpu.CompilerParams(
            dimension_semantics=("parallel", "arbitrary")),
    )(A, Wm, s2, b2)

    # Un-flatten: rows are padded-grid positions; drop the halo/garbage ones.
    out = jnp.pad(out, ((0, halo), (0, 0)))
    return out.reshape(n, hp, wp, cout)[:, :oh, :ow, :]


def _conv2d_im2col(x, p, stride, padding, act, alpha, residual):
    """Explicit im2col fallback (only conv1 7x7/2 and the three 3x3/2 convs)."""
    n, h, w_, cin = x.shape
    kh, kw, _, cout = p["w"].shape
    if padding:
        x = jnp.pad(x, ((0, 0), (padding, padding), (padding, padding), (0, 0)))
    oh = (h + 2 * padding - kh) // stride + 1
    ow = (w_ + 2 * padding - kw) // stride + 1
    cols = [x[:, i:i + stride * oh:stride, j:j + stride * ow:stride, :]
            for i in range(kh) for j in range(kw)]
    A = jnp.concatenate(cols, axis=-1).reshape(n * oh * ow, kh * kw * cin)
    Wm = p["w"].reshape(kh * kw * cin, cout)
    res = None if residual is None else residual.reshape(n * oh * ow, cout)
    out = matmul_bn_act(A, Wm, p["scale"], p["bias"], act=act, alpha=alpha,
                        residual=res)
    return out.reshape(n, oh, ow, cout)


def conv2d(x, p, *, stride=1, padding=0, act="none", alpha=0.25,
           residual=None):
    """x: (N,H,W,Cin) bf16; p: {'w': (KH,KW,Cin,Cout), 'scale', 'bias'}."""
    kh, kw, cin, cout = p["w"].shape
    if kh == 1 and kw == 1 and padding == 0:
        if stride > 1:
            x = x[:, ::stride, ::stride, :]
        n, oh, ow, _ = x.shape
        A = x.reshape(n * oh * ow, cin)       # free reshape, no im2col
        res = None if residual is None else residual.reshape(n * oh * ow, cout)
        out = matmul_bn_act(A, p["w"].reshape(cin, cout), p["scale"],
                            p["bias"], act=act, alpha=alpha, residual=res)
        return out.reshape(n, oh, ow, cout)
    if stride == 1 and residual is None:
        out = _conv2d_s1_implicit(x, p, padding, act, alpha)
        if out is not None:
            return out
    # TODO(synk): stride-2 spatial convs could use a parity-slab implicit path.
    return _conv2d_im2col(x, p, stride, padding, act, alpha, residual)


def maxpool_3x3_s2_p1(x):
    n, h, w, c = x.shape
    oh = (h - 1) // 2 + 1
    ow = (w - 1) // 2 + 1
    hp2, wp2 = 2 * (oh + 1), 2 * (ow + 1)
    xp = jnp.pad(x, ((0, 0), (1, hp2 - h - 1), (1, wp2 - w - 1), (0, 0)),
                 constant_values=float("-inf"))
    # four parity slabs (~1x input traffic instead of nine output-sized slabs)
    s00 = xp[:, 0::2, 0::2, :]
    s01 = xp[:, 0::2, 1::2, :]
    s10 = xp[:, 1::2, 0::2, :]
    s11 = xp[:, 1::2, 1::2, :]
    slab_spec = pl.BlockSpec((1, oh + 1, ow + 1, c), lambda i: (i, 0, 0, 0))
    return pl.pallas_call(
        functools.partial(_maxpool_kernel, oh=oh, ow=ow),
        out_shape=jax.ShapeDtypeStruct((n, oh, ow, c), x.dtype),
        grid=(n,),
        in_specs=[slab_spec, slab_spec, slab_spec, slab_spec],
        out_specs=pl.BlockSpec((1, oh, ow, c), lambda i: (i, 0, 0, 0)),
        compiler_params=pltpu.CompilerParams(
            dimension_semantics=("parallel",)),
    )(s00, s01, s10, s11)


def upsample_bilinear(x, size):
    # TODO(synk): bilinear (align_corners=False) resize kept in XLA glue.
    n, _, _, c = x.shape
    return jax.image.resize(x, (n, size[0], size[1], c), method="bilinear")


# ---------------------------------------------------------------------------
# Deterministic parameter construction (eval-mode BN folded to scale/bias)
# ---------------------------------------------------------------------------
_KEY = jax.random.PRNGKey(0)
_CNT = [0]


def _next_key():
    _CNT[0] += 1
    return jax.random.fold_in(_KEY, _CNT[0])


def conv_params(cin, cout, k, *, bn=True, conv_bias=False):
    fan_in = k * k * cin
    w = jax.random.normal(_next_key(), (k, k, cin, cout),
                          jnp.float32) * jnp.sqrt(2.0 / fan_in)
    if conv_bias:
        b = jax.random.uniform(_next_key(), (cout,), jnp.float32,
                               -1.0, 1.0) / jnp.sqrt(fan_in)
    else:
        b = jnp.zeros((cout,), jnp.float32)
    if bn:
        eps = 1e-5      # gamma=1, beta=0, running_mean=0, running_var=1
        s = jnp.ones((cout,), jnp.float32) / jnp.sqrt(1.0 + eps)
        eff_b = s * b
    else:
        s = jnp.ones((cout,), jnp.float32)
        eff_b = b
    return {"w": w.astype(jnp.bfloat16), "scale": s, "bias": eff_b}


def bottleneck_params(inplanes, planes, stride):
    down = stride != 1 or inplanes != planes * 4
    return {
        "c1": conv_params(inplanes, planes, 1),
        "c2": conv_params(planes, planes, 3),
        "c3": conv_params(planes, planes * 4, 1),
        "down": conv_params(inplanes, planes * 4, 1) if down else None,
        "stride": stride,
    }


def make_layer(inplanes, planes, blocks, stride):
    layers = [bottleneck_params(inplanes, planes, stride)]
    inplanes = planes * 4
    for _ in range(blocks - 1):
        layers.append(bottleneck_params(inplanes, planes, 1))
    return layers, inplanes


def make_params():
    p = {}
    p["conv1"] = conv_params(3, 64, 7)                      # conv1_RGB + bn1_RGB
    inpl = 64
    p["layer1"], inpl = make_layer(inpl, 64, 3, 1)          # conv2_RGB
    p["layer2"], inpl = make_layer(inpl, 128, 4, 2)         # conv3_RGB
    p["layer3"], inpl = make_layer(inpl, 256, 23, 2)        # conv4_RGB
    p["layer4"], inpl = make_layer(inpl, 512, 3, 2)         # conv5_RGB
    for tag in ("depth", "sal"):
        p[f"T5_{tag}"] = conv_params(2048, 256, 1, conv_bias=True)
        p[f"T4_{tag}"] = conv_params(1024, 256, 1, conv_bias=True)
        p[f"T3_{tag}"] = conv_params(512, 256, 1, conv_bias=True)
        p[f"T2_{tag}"] = conv_params(256, 256, 1, conv_bias=True)
        p[f"T1_{tag}"] = conv_params(64, 64, 1, conv_bias=True)
        p[f"output4_{tag}"] = conv_params(256, 256, 3, conv_bias=True)
        p[f"output3_{tag}"] = conv_params(256, 256, 3, conv_bias=True)
        p[f"output2_{tag}"] = conv_params(256, 64, 3, conv_bias=True)
        p[f"output1_{tag}"] = conv_params(64, 1, 3, bn=False, conv_bias=True)
        # sideout* heads are not part of the eval-mode return tuple -> skipped.
    return p


# ---------------------------------------------------------------------------
# Forward pass (stage1, eval mode)
# ---------------------------------------------------------------------------
def bottleneck_fwd(x, p):
    identity = x
    out = conv2d(x, p["c1"], act="relu")
    out = conv2d(out, p["c2"], stride=p["stride"], padding=1, act="relu")
    if p["down"] is not None:
        identity = conv2d(x, p["down"], stride=p["stride"])
    # relu(bn3(conv3(out)) + identity) -- residual + relu fused in the kernel
    return conv2d(out, p["c3"], act="relu", residual=identity)


def run_layer(x, layer):
    for blk in layer:
        x = bottleneck_fwd(x, blk)
    return x


def stage1_forward(params, x_nchw):
    x = jnp.transpose(x_nchw, (0, 2, 3, 1)).astype(jnp.bfloat16)  # NCHW -> NHWC
    inp_hw = x.shape[1:3]

    e1 = conv2d(x, params["conv1"], stride=2, padding=3, act="relu")
    xm = maxpool_3x3_s2_p1(e1)
    e2 = run_layer(xm, params["layer1"])
    e3 = run_layer(e2, params["layer2"])
    e4 = run_layer(e3, params["layer3"])
    e5 = run_layer(e4, params["layer4"])

    def decode(tag):
        T5 = conv2d(e5, params[f"T5_{tag}"], act="prelu")
        T4 = conv2d(e4, params[f"T4_{tag}"], act="prelu")
        T3 = conv2d(e3, params[f"T3_{tag}"], act="prelu")
        T2 = conv2d(e2, params[f"T2_{tag}"], act="prelu")
        T1 = conv2d(e1, params[f"T1_{tag}"], act="prelu")
        # sideout5/4/3/2 are dead code in eval mode (not returned) -> skipped.
        o4 = conv2d(upsample_bilinear(T5, e4.shape[1:3]) + T4,
                    params[f"output4_{tag}"], padding=1, act="prelu")
        o3 = conv2d(upsample_bilinear(o4, e3.shape[1:3]) + T3,
                    params[f"output3_{tag}"], padding=1, act="prelu")
        o2 = conv2d(upsample_bilinear(o3, e2.shape[1:3]) + T2,
                    params[f"output2_{tag}"], padding=1, act="prelu")
        o1 = conv2d(upsample_bilinear(o2, e1.shape[1:3]) + T1,
                    params[f"output1_{tag}"], padding=1)
        o1 = jax.nn.sigmoid(
            upsample_bilinear(o1, inp_hw).astype(jnp.float32))
        return o4, o3, o2, o1

    o4_d, o3_d, o2_d, o1_d = decode("depth")
    o4_s, o3_s, o2_s, o1_s = decode("sal")

    def nchw(t):
        return jnp.transpose(t, (0, 3, 1, 2)).astype(jnp.float32)

    # eval-mode return tuple of stage1.forward
    return (nchw(e1), nchw(e2), nchw(e3), nchw(e4), nchw(e5),
            nchw(o4_d), nchw(o3_d), nchw(o2_d), nchw(o1_d),
            nchw(o4_s), nchw(o3_s), nchw(o2_s), nchw(o1_s))


if __name__ == "__main__":
    params = make_params()
    x = jax.random.normal(jax.random.PRNGKey(0), (2, 3, 64, 64), jnp.float32)
    outs = stage1_forward(params, x)
    outs = jax.block_until_ready(outs)
    assert outs[0].shape == (2, 64, 32, 32)      # e1
    assert outs[4].shape == (2, 2048, 2, 2)      # e5
    assert outs[5].shape == (2, 256, 4, 4)       # output4_depth
    assert outs[8].shape == (2, 1, 64, 64)       # sigmoid(output1_depth)
    assert outs[12].shape == (2, 1, 64, 64)      # sigmoid(output1_sal)
    print("KERNEL_OK")
</pallas_src>

<mosaic_0001>
module attributes {stable_mosaic.version = 11 : i64} {
  func.func @_mm_kernel(%arg0: i32, %arg1: i32, %arg2: i32, %arg3: memref<128x147xbf16, #tpu.memory_space<vmem>>, %arg4: memref<147x64xbf16, #tpu.memory_space<vmem>>, %arg5: memref<1x64xf32, #tpu.memory_space<vmem>>, %arg6: memref<1x64xf32, #tpu.memory_space<vmem>>, %arg7: memref<128x64xbf16, #tpu.memory_space<vmem>>, %arg8: memref<128x64xf32, #tpu.memory_space<vmem>>) attributes {dimension_semantics = [#tpu.dimension_semantics<parallel>, #tpu.dimension_semantics<parallel>, #tpu.dimension_semantics<arbitrary>], iteration_bounds = array<i64: 16, 1, 1>, scalar_prefetch = 0 : i64, scratch_operands = 1 : i64, tpu.core_type = #tpu.core_type<tc>, window_params = [{transform_indices = @transform_0, window_bounds = array<i64: 128, 147>}, {transform_indices = @transform_1, window_bounds = array<i64: 147, 64>}, {transform_indices = @transform_2, window_bounds = array<i64: 1, 64>}, {transform_indices = @transform_3, window_bounds = array<i64: 1, 64>}, {transform_indices = @transform_4, window_bounds = array<i64: 128, 64>}]} {
    %c0_i32 = arith.constant 0 : i32
    %0 = arith.cmpi eq, %arg2, %c0_i32 : i32
    %1 = arith.extui %0 : i1 to i32
    %c0_i32_0 = arith.constant 0 : i32
    %2 = arith.cmpi ne, %1, %c0_i32_0 : i32
    scf.if %2 {
      %cst_10 = arith.constant 0.000000e+00 : f32
      %12 = vector.broadcast %cst_10 : f32 to vector<128x64xf32>
      %c0_11 = arith.constant 0 : index
      %c0_12 = arith.constant 0 : index
      %13 = vector.load %arg8[%c0_11, %c0_12] : memref<128x64xf32, #tpu.memory_space<vmem>>, vector<128x64xf32>
      tpu.vector_store %arg8[%c0_11, %c0_12], %12 {strides = array<i32>} : memref<128x64xf32, #tpu.memory_space<vmem>>, vector<128x64xf32>,
    } else {
    }
    %c0 = arith.constant 0 : index
    %c0_1 = arith.constant 0 : index
    %3 = vector.load %arg8[%c0, %c0_1] : memref<128x64xf32, #tpu.memory_space<vmem>>, vector<128x64xf32>
    %c0_2 = arith.constant 0 : index
    %c0_3 = arith.constant 0 : index
    %4 = vector.load %arg3[%c0_2, %c0_3] : memref<128x147xbf16, #tpu.memory_space<vmem>>, vector<128x147xbf16>
    %c0_4 = arith.constant 0 : index
    %c0_5 = arith.constant 0 : index
    %5 = vector.load %arg4[%c0_4, %c0_5] : memref<147x64xbf16, #tpu.memory_space<vmem>>, vector<147x64xbf16>
    %cst = arith.constant dense<0.000000e+00> : vector<128x64xf32>
    %6 = tpu.matmul %4, %5, %cst {dimension_numbers = #tpu.dot_dimension_numbers<[1], [0], [0], [1], [0, 0, 1, 1], [], []>} : vector<128x147xbf16>, vector<147x64xbf16>, vector<128x64xf32> -> vector<128x64xf32>
    %7 = arith.addf %3, %6 : vector<128x64xf32>
    %c0_6 = arith.constant 0 : index
    %c0_7 = arith.constant 0 : index
    %8 = vector.load %arg8[%c0_6, %c0_7] : memref<128x64xf32, #tpu.memory_space<vmem>>, vector<128x64xf32>
    tpu.vector_store %arg8[%c0_6, %c0_7], %7 {strides = array<i32>} : memref<128x64xf32, #tpu.memory_space<vmem>>, vector<128x64xf32>,
    %c0_i32_8 = arith.constant 0 : i32
    %9 = arith.cmpi eq, %arg2, %c0_i32_8 : i32
    %10 = arith.extui %9 : i1 to i32
    %c0_i32_9 = arith.constant 0 : i32
    %11 = arith.cmpi ne, %10, %c0_i32_9 : i32
    scf.if %11 {
      %c0_10 = arith.constant 0 : index
      %c0_11 = arith.constant 0 : index
      %12 = vector.load %arg8[%c0_10, %c0_11] : memref<128x64xf32, #tpu.memory_space<vmem>>, vector<128x64xf32>
      %c0_12 = arith.constant 0 : index
      %c0_13 = arith.constant 0 : index
      %13 = vector.load %arg5[%c0_12, %c0_13] : memref<1x64xf32, #tpu.memory_space<vmem>>, vector<1x64xf32>
      %14 = vector.broadcast %13 : vector<1x64xf32> to vector<128x64xf32>
      %15 = arith.mulf %12, %14 : vector<128x64xf32>
      %c0_14 = arith.constant 0 : index
      %c0_15 = arith.constant 0 : index
      %16 = vector.load %arg6[%c0_14, %c0_15] : memref<1x64xf32, #tpu.memory_space<vmem>>, vector<1x64xf32>
      %17 = vector.broadcast %16 : vector<1x64xf32> to vector<128x64xf32>
      %18 = arith.addf %15, %17 : vector<128x64xf32>
      %cst_16 = arith.constant 0.000000e+00 : f32
      %19 = vector.broadcast %cst_16 : f32 to vector<128x64xf32>
      %20 = arith.maximumf %18, %19 : vector<128x64xf32>
      %21 = arith.truncf %20 : vector<128x64xf32> to vector<128x64xbf16>
      %c0_17 = arith.constant 0 : index
      %c0_18 = arith.constant 0 : index
      %22 = vector.load %arg7[%c0_17, %c0_18] : memref<128x64xbf16, #tpu.memory_space<vmem>>, vector<128x64xbf16>
      tpu.vector_store %arg7[%c0_17, %c0_18], %21 {strides = array<i32>} : memref<128x64xbf16, #tpu.memory_space<vmem>>, vector<128x64xbf16>,
    } else {
    }
    return
  }
  func.func @transform_0(%arg0: i32, %arg1: i32, %arg2: i32) -> (i32, i32) {
    %c0_i32 = arith.constant 0 : i32
    return %arg0, %arg2 : i32, i32
  }
  func.func @transform_1(%arg0: i32, %arg1: i32, %arg2: i32) -> (i32, i32) {
    %c0_i32 = arith.constant 0 : i32
    return %arg2, %arg1 : i32, i32
  }
  func.func @transform_2(%arg0: i32, %arg1: i32, %arg2: i32) -> (i32, i32) {
    %c0_i32 = arith.constant 0 : i32
    %c0_i32_0 = arith.constant 0 : i32
    return %c0_i32, %arg1 : i32, i32
  }
  func.func @transform_3(%arg0: i32, %arg1: i32, %arg2: i32) -> (i32, i32) {
    %c0_i32 = arith.constant 0 : i32
    %c0_i32_0 = arith.constant 0 : i32
    return %c0_i32, %arg1 : i32, i32
  }
  func.func @transform_4(%arg0: i32, %arg1: i32, %arg2: i32) -> (i32, i32) {
    %c0_i32 = arith.constant 0 : i32
    return %arg0, %arg1 : i32, i32
  }
}

</mosaic_0001>

<llo_original>
// kernel: tpu_custom_call.1
$region0: #{tpu_custom_call.1}
  #allocation0 [shape = 'u32[]', space=smem, size = 0x4, offset = 0x4, fixed_abs, tag = 'smem constant byte address 0x4 - core index']
  #allocation1 [shape = 'u32[72,128]{1,0:T(1,128)}', space=vmem, size = 0x9000, scoped, tag = 'internal scratch']
  #allocation2 [shape = 'f32[128,64]{1,0:T(8,128)}', space=vmem, size = 0x10000, scoped, tag = 'scratch operand']
  %s0 = inlined_call_operand.vmem [shape: bf16[2048,147], index: 0, kind: input, shape index: {}]
  %s1 = inlined_call_operand.vmem [shape: bf16[147,64], index: 1, kind: input, shape index: {}]
  %s2 = inlined_call_operand.vmem [shape: f32[1,64], index: 2, kind: input, shape index: {}]
  %s3 = inlined_call_operand.vmem [shape: f32[1,64], index: 3, kind: input, shape index: {}]
  %s4 = inlined_call_operand.vmem [shape: bf16[2048,64], index: 4, kind: output, shape index: {}]
  %s5 = sld [smem:[#allocation0]]
  $region57: #{tpu_custom_call.1} parent=0
    _
  %s7 = ssub.s32 1, %s5
  %s8 = scalar_select 0, %s7, %s5
  loop: start=0, step=1, limit=18
  $region2: #{tpu_custom_call.1} parent=0 // loop_pre_header
    _
  $region3: #{tpu_custom_call.1} parent=0 // loop_header
    %s10 = sphi 0, %s14
    %p11 = scmp.ge.s32.totalorder %s10, 18
    %s17 = sphi 0, %s36
    %s18 = sphi 0, %s32
    %s19 = sphi 0, %s28
    %s20 = sphi 0, %s17
    %s21 = sphi 0, %s18
    %s22 = sphi 0, %s19
    %s23 = sphi 0, %s20
    %s24 = sphi 0, %s21
    %s25 = sphi 0, %s22
    %s41 = sphi 0, %s43
    %s44 = sphi 0, %s41
    %s45 = sphi 0, %s44
    %s61 = sphi 0, %s45
    %s69 = sphi 0, %s71
    %s72 = sphi 0, %s69
    %s73 = sphi 0, %s72
    %s89 = sphi 0, %s73
    %s95 = sphi 0, %s97
    %s98 = sphi 0, %s95
    %s99 = sphi 0, %s98
    %s115 = sphi 0, %s99
    %s121 = sphi 0, %s123
    %s124 = sphi 0, %s121
    %s125 = sphi 0, %s124
    %s141 = sphi 0, %s125
    %s149 = sphi 0, %s151
    %s152 = sphi 0, %s149
    %s153 = sphi 0, %s152
    %s169 = sphi 0, %s153
  $region4: #{tpu_custom_call.1} parent=0 // loop_header_branch
    %13 = sbr.rel (%p11) target = $region8
  $region5: #{tpu_custom_call.1} parent=0 // loop_body
    %s15 = ssub.s32 %s10, 1
    %s16 = ssub.s32 %s10, 2
    %s26 = sadd.s32 1, %s19
    %p27 = scmp.ge.s32.totalorder %s26, 1
    %s28 = scalar_select %p27, 0, %s26
    %s29 = sadd.s32 1, %s18
    %s30 = scalar_select %p27, %s29, %s18
    %p31 = scmp.ge.s32.totalorder %s30, 1
    %s32 = scalar_select %p31, 0, %s30
    %s33 = sadd.s32 1, %s17
    %s34 = scalar_select %p31, %s33, %s17
    %p35 = scmp.ge.s32.totalorder %s34, 16
    %s36 = scalar_select %p35, 0, %s34
    %s37 = ssub.s32 %s17, %s36
    %s38 = ssub.s32 %s19, %s28
    %s39 = sor.u32 %s37, %s38
    %p40 = scmp.eq.s32.totalorder %s39, 0
    %s42 = sadd.s32 %s41, 1
    %s43 = scalar_select %p40, %s41, %s42
    %p46 = pneg %p40
    %p47 = scmp.eq.s32.totalorder %s10, 15
    %p48 = por %p46, %p47
    %p49 = scmp.ne.s32.totalorder %s41, %s44
    %p50 = scmp.eq.s32.totalorder %s10, 0
    %p51 = por %p49, %p50
    %p52 = scmp.ne.s32.totalorder %s41, %s44
    %p53 = scmp.eq.s32.totalorder %s15, 15
    %p54 = por %p52, %p53
    %p55 = scmp.ne.s32.totalorder %s44, %s45
    %p56 = scmp.eq.s32.totalorder %s15, 0
    %p57 = por %p55, %p56
    %p58 = scmp.ne.s32.totalorder %s44, %s45
    %p59 = scmp.eq.s32.totalorder %s16, 15
    %p60 = por %p58, %p59
    %p62 = scmp.ne.s32.totalorder %s45, %s61
    %p63 = scmp.eq.s32.totalorder %s16, 0
    %p64 = por %p62, %p63
    %s65 = ssub.s32 %s19, %s28
    %s66 = ssub.s32 %s18, %s32
    %s67 = sor.u32 %s65, %s66
    %p68 = scmp.eq.s32.totalorder %s67, 0
    %s70 = sadd.s32 %s69, 1
    %s71 = scalar_select %p68, %s69, %s70
    %p74 = pneg %p68
    %p75 = scmp.eq.s32.totalorder %s10, 15
    %p76 = por %p74, %p75
    %p77 = scmp.ne.s32.totalorder %s69, %s72
    %p78 = scmp.eq.s32.totalorder %s10, 0
    %p79 = por %p77, %p78
    %p80 = scmp.ne.s32.totalorder %s69, %s72
    %p81 = scmp.eq.s32.totalorder %s15, 15
    %p82 = por %p80, %p81
    %p83 = scmp.ne.s32.totalorder %s72, %s73
    %p84 = scmp.eq.s32.totalorder %s15, 0
    %p85 = por %p83, %p84
    %p86 = scmp.ne.s32.totalorder %s72, %s73
    %p87 = scmp.eq.s32.totalorder %s16, 15
    %p88 = por %p86, %p87
    %p90 = scmp.ne.s32.totalorder %s73, %s89
    %p91 = scmp.eq.s32.totalorder %s16, 0
    %p92 = por %p90, %p91
    %s93 = ssub.s32 %s18, %s32
    %p94 = scmp.eq.s32.totalorder %s93, 0
    %s96 = sadd.s32 %s95, 1
    %s97 = scalar_select %p94, %s95, %s96
    %p100 = pneg %p94
    %p101 = scmp.eq.s32.totalorder %s10, 15
    %p102 = por %p100, %p101
    %p103 = scmp.ne.s32.totalorder %s95, %s98
    %p104 = scmp.eq.s32.totalorder %s10, 0
    %p105 = por %p103, %p104
    %p106 = scmp.ne.s32.totalorder %s95, %s98
    %p107 = scmp.eq.s32.totalorder %s15, 15
    %p108 = por %p106, %p107
    %p109 = scmp.ne.s32.totalorder %s98, %s99
    %p110 = scmp.eq.s32.totalorder %s15, 0
    %p111 = por %p109, %p110
    %p112 = scmp.ne.s32.totalorder %s98, %s99
    %p113 = scmp.eq.s32.totalorder %s16, 15
    %p114 = por %p112, %p113
    %p116 = scmp.ne.s32.totalorder %s99, %s115
    %p117 = scmp.eq.s32.totalorder %s16, 0
    %p118 = por %p116, %p117
    %s119 = ssub.s32 %s18, %s32
    %p120 = scmp.eq.s32.totalorder %s119, 0
    %s122 = sadd.s32 %s121, 1
    %s123 = scalar_select %p120, %s121, %s122
    %p126 = pneg %p120
    %p127 = scmp.eq.s32.totalorder %s10, 15
    %p128 = por %p126, %p127
    %p129 = scmp.ne.s32.totalorder %s121, %s124
    %p130 = scmp.eq.s32.totalorder %s10, 0
    %p131 = por %p129, %p130
    %p132 = scmp.ne.s32.totalorder %s121, %s124
    %p133 = scmp.eq.s32.totalorder %s15, 15
    %p134 = por %p132, %p133
    %p135 = scmp.ne.s32.totalorder %s124, %s125
    %p136 = scmp.eq.s32.totalorder %s15, 0
    %p137 = por %p135, %p136
    %p138 = scmp.ne.s32.totalorder %s124, %s125
    %p139 = scmp.eq.s32.totalorder %s16, 15
    %p140 = por %p138, %p139
    %p142 = scmp.ne.s32.totalorder %s125, %s141
    %p143 = scmp.eq.s32.totalorder %s16, 0
    %p144 = por %p142, %p143
    %s145 = ssub.s32 %s17, %s36
    %s146 = ssub.s32 %s18, %s32
    %s147 = sor.u32 %s145, %s146
    %p148 = scmp.eq.s32.totalorder %s147, 0
    %s150 = sadd.s32 %s149, 1
    %s151 = scalar_select %p148, %s149, %s150
    %p154 = pneg %p148
    %p155 = scmp.eq.s32.totalorder %s10, 15
    %p156 = por %p154, %p155
    %p157 = scmp.ne.s32.totalorder %s149, %s152
    %p158 = scmp.eq.s32.totalorder %s10, 0
    %p159 = por %p157, %p158
    %p160 = scmp.ne.s32.totalorder %s149, %s152
    %p161 = scmp.eq.s32.totalorder %s15, 15
    %p162 = por %p160, %p161
    %p163 = scmp.ne.s32.totalorder %s152, %s153
    %p164 = scmp.eq.s32.totalorder %s15, 0
    %p165 = por %p163, %p164
    %p166 = scmp.ne.s32.totalorder %s152, %s153
    %p167 = scmp.eq.s32.totalorder %s16, 15
    %p168 = por %p166, %p167
    %p170 = scmp.ne.s32.totalorder %s153, %s169
    %p171 = scmp.eq.s32.totalorder %s16, 0
    %p172 = por %p170, %p171
    %p173 = scmp.le.s32.totalorder 1, %s10
    %p174 = scmp.lt.s32.totalorder %s10, 17
    %p175 = pnand %p173, %p174
    %p176 = pneg %p175
    // Predicated region
    $region9: #{tpu_custom_call.1} parent=5 // pred_check
      _
    $region10: #{tpu_custom_call.1} parent=5 // pred_check_branch
      %178 = sbr.rel (%p175) target = $region12
    $region11: #{tpu_custom_call.1} parent=5 // pred_region
      %s179 = ssub.s32 %s10, 1
      // Predicated region
      $region13: #{tpu_custom_call.1} parent=11 // pred_check
        %p180 = pneg %p85
      $region14: #{tpu_custom_call.1} parent=11 // pred_check_branch
        %182 = sbr.rel (%p180) target = $region16
      $region15: #{tpu_custom_call.1} parent=11 // pred_region
        %s183 = smul.u32 19, %s22
        %p184 = scmp.lt.s32.totalorder %s183, 18
        %s185 = scalar_select %p184, %s183, 18
        %p186 = scmp.lt.s32.totalorder %s21, 0
        %s187 = scalar_select %p186, %s21, 0
        %s188 = sadd.s32 %s187, %s185
        %s189 = smul.addr %s188, 4
        %s190 = scalar_lea.vmem %s1, %s189
        %s191 = smul.u32 19, %s22
      $region16: #{tpu_custom_call.1} parent=11 // pred_fallthru
        _
      // Predicated region
      $region17: #{tpu_custom_call.1} parent=11 // pred_check
        %p192 = pneg %p111
      $region18: #{tpu_custom_call.1} parent=11 // pred_check_branch
        %194 = sbr.rel (%p192) target = $region20
      $region19: #{tpu_custom_call.1} parent=11 // pred_region
        %p195 = scmp.lt.s32.totalorder %s21, 0
        %s196 = scalar_select %p195, %s21, 0
        %s197 = scalar_lea.vmem %s2, %s196
      $region20: #{tpu_custom_call.1} parent=11 // pred_fallthru
        _
      // Predicated region
      $region21: #{tpu_custom_call.1} parent=11 // pred_check
        %p198 = pneg %p137
      $region22: #{tpu_custom_call.1} parent=11 // pred_check_branch
        %200 = sbr.rel (%p198) target = $region24
      $region23: #{tpu_custom_call.1} parent=11 // pred_region
        %p201 = scmp.lt.s32.totalorder %s21, 0
        %s202 = scalar_select %p201, %s21, 0
        %s203 = scalar_lea.vmem %s3, %s202
      $region24: #{tpu_custom_call.1} parent=11 // pred_fallthru
        _
    $region12: #{tpu_custom_call.1} parent=5 // pred_fallthru
      _
    %p204 = scmp.lt.s32.totalorder %s10, 16
    // Predicated region
    $region25: #{tpu_custom_call.1} parent=5 // pred_check
      %p205 = pneg %p204
    $region26: #{tpu_custom_call.1} parent=5 // pred_check_branch
      %207 = sbr.rel (%p205) target = $region28
    $region27: #{tpu_custom_call.1} parent=5 // pred_region
      // Predicated region
      $region29: #{tpu_custom_call.1} parent=27 // pred_check
        %p208 = pneg %p51
      $region30: #{tpu_custom_call.1} parent=27 // pred_check_branch
        %210 = sbr.rel (%p208) target = $region32
      $region31: #{tpu_custom_call.1} parent=27 // pred_region
        %s211 = smul.u32 16, %s17
        %s212 = smul.u32 2, %s19
        %p213 = scmp.lt.s32.totalorder %s211, 255
        %s214 = scalar_select %p213, %s211, 255
        %p215 = scmp.lt.s32.totalorder %s212, 1
        %s216 = scalar_select %p215, %s212, 1
        %s217 = smul.addr %s214, 2
        %s218 = sadd.s32 %s216, %s217
        %s219 = smul.addr %s218, 4
        %s220 = scalar_lea.vmem %s0, %s219
        %s221 = smul.u32 16, %s17
        %s222 = smul.u32 2, %s19
      $region32: #{tpu_custom_call.1} parent=27 // pred_fallthru
        _
    $region28: #{tpu_custom_call.1} parent=5 // pred_fallthru
      _
    %p223 = scmp.le.s32.totalorder 1, %s10
    %p224 = scmp.lt.s32.totalorder %s10, 17
    %p225 = pnand %p223, %p224
    %p226 = pneg %p225
    // Predicated region
    $region33: #{tpu_custom_call.1} parent=5 // pred_check
      _
    $region34: #{tpu_custom_call.1} parent=5 // pred_check_branch
      %228 = sbr.rel (%p225) target = $region36
    $region35: #{tpu_custom_call.1} parent=5 // pred_region
      %s229 = ssub.s32 %s10, 1
      %s230 = smul.u32 16, %s20
      %s231 = smul.u32 2, %s22
      %p232 = scmp.lt.s32.totalorder %s230, 255
      %s233 = scalar_select %p232, %s230, 255
      %p234 = scmp.lt.s32.totalorder %s231, 1
      %s235 = scalar_select %p234, %s231, 1
      %s236 = smul.addr %s233, 2
      %s237 = sadd.s32 %s235, %s236
      %s238 = smul.addr %s237, 4
      %s239 = scalar_lea.vmem %s0, %s238
      %p240 = pneg %p57
      %p241 = pneg %p54
      %s242 = smul.u32 19, %s22
      %p243 = scmp.lt.s32.totalorder %s242, 18
      %s244 = scalar_select %p243, %s242, 18
      %p245 = scmp.lt.s32.totalorder %s21, 0
      %s246 = scalar_select %p245, %s21, 0
      %s247 = sadd.s32 %s246, %s244
      %s248 = smul.addr %s247, 4
      %s249 = scalar_lea.vmem %s1, %s248
      %p250 = pneg %p85
      %p251 = pneg %p82
      %p252 = scmp.lt.s32.totalorder %s21, 0
      %s253 = scalar_select %p252, %s21, 0
      %s254 = scalar_lea.vmem %s2, %s253
      %p255 = pneg %p111
      %p256 = pneg %p108
      %p257 = scmp.lt.s32.totalorder %s21, 0
      %s258 = scalar_select %p257, %s21, 0
      %s259 = scalar_lea.vmem %s3, %s258
      %p260 = pneg %p137
      %p261 = pneg %p134
      %p262 = pneg %p165
      %p263 = pneg %p162
      %s264 = smul.u32 16, %s20
      %p265 = scmp.lt.s32.totalorder %s264, 255
      %s266 = scalar_select %p265, %s264, 255
      %p267 = scmp.lt.s32.totalorder %s21, 0
      %s268 = scalar_select %p267, %s21, 0
      %s269 = sadd.s32 %s268, %s266
      %s270 = smul.addr %s269, 4
      %s271 = scalar_lea.vmem %s4, %s270
      %s272 = smul.u32 16, %s20
      %s273 = smul.u32 2, %s22
      %p274 = scmp.lt.s32.totalorder %s272, 255
      %s275 = scalar_select %p274, %s272, 255
      %p276 = scmp.lt.s32.totalorder %s273, 1
      %s277 = scalar_select %p276, %s273, 1
      %s278 = smul.addr %s275, 2
      %s279 = sadd.s32 %s277, %s278
      %s280 = smul.addr %s279, 4
      %s281 = scalar_lea.vmem %s0, %s280
      %s282 = smul.u32 16, %s20
      %s283 = smul.u32 2, %s22
      %s284 = smul.u32 19, %s22
      %p285 = scmp.lt.s32.totalorder %s284, 18
      %s286 = scalar_select %p285, %s284, 18
      %p287 = scmp.lt.s32.totalorder %s21, 0
      %s288 = scalar_select %p287, %s21, 0
      %s289 = sadd.s32 %s288, %s286
      %s290 = smul.addr %s289, 4
      %s291 = scalar_lea.vmem %s1, %s290
      %s292 = smul.u32 19, %s22
      %p293 = scmp.lt.s32.totalorder %s21, 0
      %s294 = scalar_select %p293, %s21, 0
      %s295 = scalar_lea.vmem %s2, %s294
      %p296 = scmp.lt.s32.totalorder %s21, 0
      %s297 = scalar_select %p296, %s21, 0
      %s298 = scalar_lea.vmem %s3, %s297
      %s299 = smul.u32 16, %s20
      %p300 = scmp.lt.s32.totalorder %s299, 255
      %s301 = scalar_select %p300, %s299, 255
      %p302 = scmp.lt.s32.totalorder %s21, 0
      %s303 = scalar_select %p302, %s21, 0
      %s304 = sadd.s32 %s303, %s301
      %s305 = smul.addr %s304, 4
      %s306 = scalar_lea.vmem %s4, %s305
      %s307 = smul.u32 16, %s20
      %p309 = scmp.eq.s32.totalorder %s22, 0
      // Predicated region
      $region37: #{tpu_custom_call.1} parent=35 // pred_check
        %p310 = pneg %p309
      $region38: #{tpu_custom_call.1} parent=35 // pred_check_branch
        %312 = sbr.rel (%p310) target = $region40
      $region39: #{tpu_custom_call.1} parent=35 // pred_region
        %vm313 = vcmask 523264
        %314 = vst.msk [vmem:[#allocation2] sm:$0xff] %vm313, 0.0
        %315 = vst.msk [vmem:[#allocation2 + $0x8] sm:$0xff] %vm313, 0.0
        %316 = vst.msk [vmem:[#allocation2 + $0x10] sm:$0xff] %vm313, 0.0
        %317 = vst.msk [vmem:[#allocation2 + $0x18] sm:$0xff] %vm313, 0.0
        %318 = vst.msk [vmem:[#allocation2 + $0x20] sm:$0xff] %vm313, 0.0
        %319 = vst.msk [vmem:[#allocation2 + $0x28] sm:$0xff] %vm313, 0.0
        %320 = vst.msk [vmem:[#allocation2 + $0x30] sm:$0xff] %vm313, 0.0
        %321 = vst.msk [vmem:[#allocation2 + $0x38] sm:$0xff] %vm313, 0.0
        %322 = vst.msk [vmem:[#allocation2 + $0x40] sm:$0xff] %vm313, 0.0
        %323 = vst.msk [vmem:[#allocation2 + $0x48] sm:$0xff] %vm313, 0.0
        %324 = vst.msk [vmem:[#allocation2 + $0x50] sm:$0xff] %vm313, 0.0
        %325 = vst.msk [vmem:[#allocation2 + $0x58] sm:$0xff] %vm313, 0.0
        %326 = vst.msk [vmem:[#allocation2 + $0x60] sm:$0xff] %vm313, 0.0
        %327 = vst.msk [vmem:[#allocation2 + $0x68] sm:$0xff] %vm313, 0.0
        %328 = vst.msk [vmem:[#allocation2 + $0x70] sm:$0xff] %vm313, 0.0
        %329 = vst.msk [vmem:[#allocation2 + $0x78] sm:$0xff] %vm313, 0.0
      $region40: #{tpu_custom_call.1} parent=35 // pred_fallthru
        _
      %v330 = vld [vmem:[#allocation2] sm:$0xff]
      %v331 = vld [vmem:[#allocation2 + $0x8] sm:$0xff]
      %v332 = vld [vmem:[#allocation2 + $0x10] sm:$0xff]
      %v333 = vld [vmem:[#allocation2 + $0x18] sm:$0xff]
      %v334 = vld [vmem:[#allocation2 + $0x20] sm:$0xff]
      %v335 = vld [vmem:[#allocation2 + $0x28] sm:$0xff]
      %v336 = vld [vmem:[#allocation2 + $0x30] sm:$0xff]
      %v337 = vld [vmem:[#allocation2 + $0x38] sm:$0xff]
      %v338 = vld [vmem:[#allocation2 + $0x40] sm:$0xff]
      %v339 = vld [vmem:[#allocation2 + $0x48] sm:$0xff]
      %v340 = vld [vmem:[#allocation2 + $0x50] sm:$0xff]
      %v341 = vld [vmem:[#allocation2 + $0x58] sm:$0xff]
      %v342 = vld [vmem:[#allocation2 + $0x60] sm:$0xff]
      %v343 = vld [vmem:[#allocation2 + $0x68] sm:$0xff]
      %v344 = vld [vmem:[#allocation2 + $0x70] sm:$0xff]
      %v345 = vld [vmem:[#allocation2 + $0x78] sm:$0xff]
      %v346 = vld [vmem:[%s281] sm:$0xff]
      %v347 = vld [vmem:[%s281 + $0x8] sm:$0xff]
      %v348 = vld [vmem:[%s281 + $0x10] sm:$0xff]
      %v349 = vld [vmem:[%s281 + $0x18] sm:$0xff]
      %v350 = vld [vmem:[%s281 + $0x20] sm:$0xff]
      %v351 = vld [vmem:[%s281 + $0x28] sm:$0xff]
      %v352 = vld [vmem:[%s281 + $0x30] sm:$0xff]
      %v353 = vld [vmem:[%s281 + $0x38] sm:$0xff]
      %v354 = vld [vmem:[%s281 + $0x40] sm:$0xff]
      %v355 = vld [vmem:[%s281 + $0x48] sm:$0xff]
      %v356 = vld [vmem:[%s281 + $0x50] sm:$0xff]
      %v357 = vld [vmem:[%s281 + $0x58] sm:$0xff]
      %v358 = vld [vmem:[%s281 + $0x60] sm:$0xff]
      %v359 = vld [vmem:[%s281 + $0x68] sm:$0xff]
      %v360 = vld [vmem:[%s281 + $0x70] sm:$0xff]
      %v361 = vld [vmem:[%s281 + $0x78] sm:$0xff]
      %v362 = vld [vmem:[%s291] sm:$0xf]
      %v363 = vld [vmem:[%s291 + $0x4] sm:$0xf]
      %v364 = vld [vmem:[%s291 + $0x8] sm:$0xf]
      %v365 = vld [vmem:[%s291 + $0xc] sm:$0xf]
      %v366 = vld [vmem:[%s291 + $0x10] sm:$0xf]
      %v367 = vld [vmem:[%s291 + $0x14] sm:$0xf]
      %v368 = vld [vmem:[%s291 + $0x18] sm:$0xf]
      %v369 = vld [vmem:[%s291 + $0x1c] sm:$0xf]
      %v370 = vld [vmem:[%s291 + $0x20] sm:$0xf]
      %v371 = vld [vmem:[%s291 + $0x24] sm:$0xf]
      %v372 = vld [vmem:[%s291 + $0x28] sm:$0xf]
      %v373 = vld [vmem:[%s291 + $0x2c] sm:$0xf]
      %v374 = vld [vmem:[%s291 + $0x30] sm:$0xf]
      %v375 = vld [vmem:[%s291 + $0x34] sm:$0xf]
      %v376 = vld [vmem:[%s291 + $0x38] sm:$0xf]
      %v377 = vld [vmem:[%s291 + $0x3c] sm:$0xf]
      %v378 = vld [vmem:[%s291 + $0x40] sm:$0xf]
      %v379 = vld [vmem:[%s291 + $0x44] sm:$0xf]
      %v380 = vld [vmem:[%s291 + $0x48] sm:$0x3]
      %v397 = vunpack.c.l.b16 %v346
      %v398 = vunpack.c.h.b16 %v346
      %v399 = vunpack.c.l.b16 %v347
      %v400 = vunpack.c.h.b16 %v347
      %v401 = vunpack.c.l.b16 %v348
      %v402 = vunpack.c.h.b16 %v348
      %v403 = vunpack.c.l.b16 %v349
      %v404 = vunpack.c.h.b16 %v349
      %v405 = vunpack.c.l.b16 %v350
      %v406 = vunpack.c.h.b16 %v350
      %v407 = vunpack.c.l.b16 %v351
      %v408 = vunpack.c.h.b16 %v351
      %v409 = vunpack.c.l.b16 %v352
      %v410 = vunpack.c.h.b16 %v352
      %v411 = vunpack.c.l.b16 %v353
      %v412 = vunpack.c.h.b16 %v353
      %v413 = vunpack.c.l.b16 %v354
      %v414 = vunpack.c.h.b16 %v354
      %v415 = vunpack.c.l.b16 %v355
      %v416 = vunpack.c.h.b16 %v355
      %v417 = vunpack.c.l.b16 %v356
      %v418 = vunpack.c.h.b16 %v356
      %v419 = vunpack.c.l.b16 %v357
      %v420 = vunpack.c.h.b16 %v357
      %v421 = vunpack.c.l.b16 %v358
      %v422 = vunpack.c.h.b16 %v358
      %v423 = vunpack.c.l.b16 %v359
      %v424 = vunpack.c.h.b16 %v359
      %v425 = vunpack.c.l.b16 %v360
      %v426 = vunpack.c.h.b16 %v360
      %v427 = vunpack.c.l.b16 %v361
      %v428 = vunpack.c.h.b16 %v361
      %v429 = vpack.c.b16 %v399, %v397
      %v430 = vpack.c.b16 %v400, %v398
      %v431 = vpack.c.b16 %v403, %v401
      %v432 = vpack.c.b16 %v404, %v402
      %v433 = vpack.c.b16 %v407, %v405
      %v434 = vpack.c.b16 %v408, %v406
      %v435 = vpack.c.b16 %v411, %v409
      %v436 = vpack.c.b16 %v412, %v410
      %v437 = vpack.c.b16 %v415, %v413
      %v438 = vpack.c.b16 %v416, %v414
      %v439 = vpack.c.b16 %v419, %v417
      %v440 = vpack.c.b16 %v420, %v418
      %v441 = vpack.c.b16 %v423, %v421
      %v442 = vpack.c.b16 %v424, %v422
      %v443 = vpack.c.b16 %v427, %v425
      %v444 = vpack.c.b16 %v428, %v426
      %v472 = vunpack.c.l.b16 %v362
      %v473 = vunpack.c.l.b16 %v363
      %v474 = vunpack.c.l.b16 %v364
      %v475 = vunpack.c.l.b16 %v365
      %v476 = vunpack.c.l.b16 %v366
      %v477 = vunpack.c.l.b16 %v367
      %v478 = vunpack.c.l.b16 %v368
      %v479 = vunpack.c.l.b16 %v369
      %v480 = vunpack.c.l.b16 %v370
      %v481 = vunpack.c.l.b16 %v371
      %v482 = vunpack.c.l.b16 %v372
      %v483 = vunpack.c.l.b16 %v373
      %v484 = vunpack.c.l.b16 %v374
      %v485 = vunpack.c.l.b16 %v375
      %v486 = vunpack.c.l.b16 %v376
      %v487 = vunpack.c.l.b16 %v377
      %v488 = vunpack.c.l.b16 %v378
      %v489 = vunpack.c.l.b16 %v379
      %v490 = vunpack.c.l.b16 %v380
      %v491 = vpack.c.b16 %v473, %v472
      %v492 = vpack.c.b16 %v475, %v474
      %v493 = vpack.c.b16 %v477, %v476
      %v494 = vpack.c.b16 %v479, %v478
      %v495 = vpack.c.b16 %v481, %v480
      %v496 = vpack.c.b16 %v483, %v482
      %v497 = vpack.c.b16 %v485, %v484
      %v498 = vpack.c.b16 %v487, %v486
      %v499 = vpack.c.b16 %v489, %v488
      %v500 = vpack.c.b16 %v490, %v490
      %vm510 = vcmask 154624
      %v512 = vsel %vm510, %v430, 0
      %v515 = vsel %vm510, %v432, 0
      %v518 = vsel %vm510, %v434, 0
      %v521 = vsel %vm510, %v436, 0
      %v524 = vsel %vm510, %v438, 0
      %v527 = vsel %vm510, %v440, 0
      %v530 = vsel %vm510, %v442, 0
      %v533 = vsel %vm510, %v444, 0
      %vm535 = vcmask 1040384
      %vm536 = vcmask 1041408
      %v537 = vsel %vm535, 4294967295, 65535
      %v538 = vsel %vm536, %v537, 0
      %v540 = vand.u32 %v500, %v538
      %542 = vmatpush.bf16.msra.mxu0 %v498
      %543 = vmatpush.bf16.msra.mxu0 %v497
      %544 = vmatpush.bf16.msra.mxu0 %v496
      %545 = vmatpush.bf16.msra.mxu0 %v495
      %546 = vmatpush.bf16.msra.mxu0 %v494
      %547 = vmatpush.bf16.msra.mxu0 %v493
      %548 = vmatpush.bf16.msra.mxu0 %v492
      %549 = vmatpush.bf16.msra.mxu0 %v491
      %550 = vmatmul.bf16.gmra.mxu0 %v429
      %v551 = vpop.f32.mrf.mxu0
      %v552 = vadd.f32 0.0, %v551
      %v553 = vpop.f32.mrf.mxu0
      %v554 = vadd.f32 0.0, %v553
      %555 = vmatmul.bf16.gmra.mxu0 %v431
      %v556 = vpop.f32.mrf.mxu0
      %v557 = vadd.f32 0.0, %v556
      %v558 = vpop.f32.mrf.mxu0
      %v559 = vadd.f32 0.0, %v558
      %560 = vmatmul.bf16.gmra.mxu0 %v433
      %v561 = vpop.f32.mrf.mxu0
      %v562 = vadd.f32 0.0, %v561
      %v563 = vpop.f32.mrf.mxu0
      %v564 = vadd.f32 0.0, %v563
      %565 = vmatmul.bf16.gmra.mxu0 %v435
      %v566 = vpop.f32.mrf.mxu0
      %v567 = vadd.f32 0.0, %v566
      %v568 = vpop.f32.mrf.mxu0
      %v569 = vadd.f32 0.0, %v568
      %570 = vmatmul.bf16.gmra.mxu0 %v437
      %v571 = vpop.f32.mrf.mxu0
      %v572 = vadd.f32 0.0, %v571
      %v573 = vpop.f32.mrf.mxu0
      %v574 = vadd.f32 0.0, %v573
      %575 = vmatmul.bf16.gmra.mxu0 %v439
      %v576 = vpop.f32.mrf.mxu0
      %v577 = vadd.f32 0.0, %v576
      %v578 = vpop.f32.mrf.mxu0
      %v579 = vadd.f32 0.0, %v578
      %580 = vmatmul.bf16.gmra.mxu0 %v441
      %v581 = vpop.f32.mrf.mxu0
      %v582 = vadd.f32 0.0, %v581
      %v583 = vpop.f32.mrf.mxu0
      %v584 = vadd.f32 0.0, %v583
      %585 = vmatmul.bf16.gmra.mxu0 %v443
      %v586 = vpop.f32.mrf.mxu0
      %v587 = vadd.f32 0.0, %v586
      %v588 = vpop.f32.mrf.mxu0
      %v589 = vadd.f32 0.0, %v588
      %590 = vdwg.mxu0
      %591 = vmatpush.bf16.msra.mxu0 0
      %592 = vmatpush.bf16.msra.mxu0 0
      %593 = vmatpush.bf16.msra.mxu0 0
      %594 = vmatpush.bf16.msra.mxu0 0
      %595 = vmatpush.bf16.msra.mxu0 0
      %596 = vmatpush.bf16.msra.mxu0 0
      %597 = vmatpush.bf16.msra.mxu0 %v540
      %598 = vmatpush.bf16.msra.mxu0 %v499
      %599 = vmatmul.bf16.gmra.mxu0 %v512
      %v600 = vpop.f32.mrf.mxu0
      %v601 = vadd.f32 %v552, %v600
      %v602 = vpop.f32.mrf.mxu0
      %v603 = vadd.f32 %v554, %v602
      %604 = vmatmul.bf16.gmra.mxu0 %v515
      %v605 = vpop.f32.mrf.mxu0
      %v606 = vadd.f32 %v557, %v605
      %v607 = vpop.f32.mrf.mxu0
      %v608 = vadd.f32 %v559, %v607
      %609 = vmatmul.bf16.gmra.mxu0 %v518
      %v610 = vpop.f32.mrf.mxu0
      %v611 = vadd.f32 %v562, %v610
      %v612 = vpop.f32.mrf.mxu0
      %v613 = vadd.f32 %v564, %v612
      %614 = vmatmul.bf16.gmra.mxu0 %v521
      %v615 = vpop.f32.mrf.mxu0
      %v616 = vadd.f32 %v567, %v615
      %v617 = vpop.f32.mrf.mxu0
      %v618 = vadd.f32 %v569, %v617
      %619 = vmatmul.bf16.gmra.mxu0 %v524
      %v620 = vpop.f32.mrf.mxu0
      %v621 = vadd.f32 %v572, %v620
      %v622 = vpop.f32.mrf.mxu0
      %v623 = vadd.f32 %v574, %v622
      %624 = vmatmul.bf16.gmra.mxu0 %v527
      %v625 = vpop.f32.mrf.mxu0
      %v626 = vadd.f32 %v577, %v625
      %v627 = vpop.f32.mrf.mxu0
      %v628 = vadd.f32 %v579, %v627
      %629 = vmatmul.bf16.gmra.mxu0 %v530
      %v630 = vpop.f32.mrf.mxu0
      %v631 = vadd.f32 %v582, %v630
      %v632 = vpop.f32.mrf.mxu0
      %v633 = vadd.f32 %v584, %v632
      %634 = vmatmul.bf16.gmra.mxu0 %v533
      %v635 = vpop.f32.mrf.mxu0
      %v636 = vadd.f32 %v587, %v635
      %v637 = vpop.f32.mrf.mxu0
      %v638 = vadd.f32 %v589, %v637
      %639 = vdwg.mxu0
      %v640 = vadd.f32 %v330, %v601
      %v641 = vadd.f32 %v331, %v603
      %v642 = vadd.f32 %v332, %v606
      %v643 = vadd.f32 %v333, %v608
      %v644 = vadd.f32 %v334, %v611
      %v645 = vadd.f32 %v335, %v613
      %v646 = vadd.f32 %v336, %v616
      %v647 = vadd.f32 %v337, %v618
      %v648 = vadd.f32 %v338, %v621
      %v649 = vadd.f32 %v339, %v623
      %v650 = vadd.f32 %v340, %v626
      %v651 = vadd.f32 %v341, %v628
      %v652 = vadd.f32 %v342, %v631
      %v653 = vadd.f32 %v343, %v633
      %v654 = vadd.f32 %v344, %v636
      %v655 = vadd.f32 %v345, %v638
      %vm656 = vcmask 523264
      %657 = vst.msk [vmem:[#allocation2] sm:$0xff] %vm656, %v640
      %658 = vst.msk [vmem:[#allocation2 + $0x8] sm:$0xff] %vm656, %v641
      %659 = vst.msk [vmem:[#allocation2 + $0x10] sm:$0xff] %vm656, %v642
      %660 = vst.msk [vmem:[#allocation2 + $0x18] sm:$0xff] %vm656, %v643
      %661 = vst.msk [vmem:[#allocation2 + $0x20] sm:$0xff] %vm656, %v644
      %662 = vst.msk [vmem:[#allocation2 + $0x28] sm:$0xff] %vm656, %v645
      %663 = vst.msk [vmem:[#allocation2 + $0x30] sm:$0xff] %vm656, %v646
      %664 = vst.msk [vmem:[#allocation2 + $0x38] sm:$0xff] %vm656, %v647
      %665 = vst.msk [vmem:[#allocation2 + $0x40] sm:$0xff] %vm656, %v648
      %666 = vst.msk [vmem:[#allocation2 + $0x48] sm:$0xff] %vm656, %v649
      %667 = vst.msk [vmem:[#allocation2 + $0x50] sm:$0xff] %vm656, %v650
      %668 = vst.msk [vmem:[#allocation2 + $0x58] sm:$0xff] %vm656, %v651
      %669 = vst.msk [vmem:[#allocation2 + $0x60] sm:$0xff] %vm656, %v652
      %670 = vst.msk [vmem:[#allocation2 + $0x68] sm:$0xff] %vm656, %v653
      %671 = vst.msk [vmem:[#allocation2 + $0x70] sm:$0xff] %vm656, %v654
      %672 = vst.msk [vmem:[#allocation2 + $0x78] sm:$0xff] %vm656, %v655
      // Predicated region
      $region41: #{tpu_custom_call.1} parent=35 // pred_check
        %p673 = pneg %p309
      $region42: #{tpu_custom_call.1} parent=35 // pred_check_branch
        %675 = sbr.rel (%p673) target = $region44
      $region43: #{tpu_custom_call.1} parent=35 // pred_region
        %v676 = vld [vmem:[#allocation2] sm:$0xff]
        %v677 = vld [vmem:[#allocation2 + $0x8] sm:$0xff]
        %v678 = vld [vmem:[#allocation2 + $0x10] sm:$0xff]
        %v679 = vld [vmem:[#allocation2 + $0x18] sm:$0xff]
        %v680 = vld [vmem:[#allocation2 + $0x20] sm:$0xff]
        %v681 = vld [vmem:[#allocation2 + $0x28] sm:$0xff]
        %v682 = vld [vmem:[#allocation2 + $0x30] sm:$0xff]
        %v683 = vld [vmem:[#allocation2 + $0x38] sm:$0xff]
        %v684 = vld [vmem:[#allocation2 + $0x40] sm:$0xff]
        %v685 = vld [vmem:[#allocation2 + $0x48] sm:$0xff]
        %v686 = vld [vmem:[#allocation2 + $0x50] sm:$0xff]
        %v687 = vld [vmem:[#allocation2 + $0x58] sm:$0xff]
        %v688 = vld [vmem:[#allocation2 + $0x60] sm:$0xff]
        %v689 = vld [vmem:[#allocation2 + $0x68] sm:$0xff]
        %v690 = vld [vmem:[#allocation2 + $0x70] sm:$0xff]
        %v691 = vld [vmem:[#allocation2 + $0x78] sm:$0xff]
        %v692 = vld [vmem:[%s295] sm:$0x1]
        %v694 = vperm.slane %v692, 0
        %v696 = vmul.f32 %v676, %v694
        %v697 = vmul.f32 %v677, %v694
        %v698 = vmul.f32 %v678, %v694
        %v699 = vmul.f32 %v679, %v694
        %v700 = vmul.f32 %v680, %v694
        %v701 = vmul.f32 %v681, %v694
        %v702 = vmul.f32 %v682, %v694
        %v703 = vmul.f32 %v683, %v694
        %v704 = vmul.f32 %v684, %v694
        %v705 = vmul.f32 %v685, %v694
        %v706 = vmul.f32 %v686, %v694
        %v707 = vmul.f32 %v687, %v694
        %v708 = vmul.f32 %v688, %v694
        %v709 = vmul.f32 %v689, %v694
        %v710 = vmul.f32 %v690, %v694
        %v711 = vmul.f32 %v691, %v694
        %v712 = vld [vmem:[%s298] sm:$0x1]
        %v714 = vperm.slane %v712, 0
        %v716 = vadd.f32 %v696, %v714
        %v717 = vadd.f32 %v697, %v714
        %v718 = vadd.f32 %v698, %v714
        %v719 = vadd.f32 %v699, %v714
        %v720 = vadd.f32 %v700, %v714
        %v721 = vadd.f32 %v701, %v714
        %v722 = vadd.f32 %v702, %v714
        %v723 = vadd.f32 %v703, %v714
        %v724 = vadd.f32 %v704, %v714
        %v725 = vadd.f32 %v705, %v714
        %v726 = vadd.f32 %v706, %v714
        %v727 = vadd.f32 %v707, %v714
        %v728 = vadd.f32 %v708, %v714
        %v729 = vadd.f32 %v709, %v714
        %v730 = vadd.f32 %v710, %v714
        %v731 = vadd.f32 %v711, %v714
        %v732 = vmax.f32 %v716, 0.0
        %v733 = vmax.f32 %v717, 0.0
        %v734 = vmax.f32 %v718, 0.0
        %v735 = vmax.f32 %v719, 0.0
        %v736 = vmax.f32 %v720, 0.0
        %v737 = vmax.f32 %v721, 0.0
        %v738 = vmax.f32 %v722, 0.0
        %v739 = vmax.f32 %v723, 0.0
        %v740 = vmax.f32 %v724, 0.0
        %v741 = vmax.f32 %v725, 0.0
        %v742 = vmax.f32 %v726, 0.0
        %v743 = vmax.f32 %v727, 0.0
        %v744 = vmax.f32 %v728, 0.0
        %v745 = vmax.f32 %v729, 0.0
        %v746 = vmax.f32 %v730, 0.0
        %v747 = vmax.f32 %v731, 0.0
        %v748 = vpack.c.bf16 %v732, %v732
        %v749 = vpack.c.bf16 %v733, %v733
        %v750 = vpack.c.bf16 %v734, %v734
        %v751 = vpack.c.bf16 %v735, %v735
        %v752 = vpack.c.bf16 %v736, %v736
        %v753 = vpack.c.bf16 %v737, %v737
        %v754 = vpack.c.bf16 %v738, %v738
        %v755 = vpack.c.bf16 %v739, %v739
        %v756 = vpack.c.bf16 %v740, %v740
        %v757 = vpack.c.bf16 %v741, %v741
        %v758 = vpack.c.bf16 %v742, %v742
        %v759 = vpack.c.bf16 %v743, %v743
        %v760 = vpack.c.bf16 %v744, %v744
        %v761 = vpack.c.bf16 %v745, %v745
        %v762 = vpack.c.bf16 %v746, %v746
        %v763 = vpack.c.bf16 %v747, %v747
        %vm764 = vcmask 519168
        %765 = vst.msk [vmem:[%s306] sm:$0xf] %vm764, %v748
        %766 = vst.msk [vmem:[%s306 + $0x4] sm:$0xf] %vm764, %v749
        %767 = vst.msk [vmem:[%s306 + $0x8] sm:$0xf] %vm764, %v750
        %768 = vst.msk [vmem:[%s306 + $0xc] sm:$0xf] %vm764, %v751
        %769 = vst.msk [vmem:[%s306 + $0x10] sm:$0xf] %vm764, %v752
        %770 = vst.msk [vmem:[%s306 + $0x14] sm:$0xf] %vm764, %v753
        %771 = vst.msk [vmem:[%s306 + $0x18] sm:$0xf] %vm764, %v754
        %772 = vst.msk [vmem:[%s306 + $0x1c] sm:$0xf] %vm764, %v755
        %773 = vst.msk [vmem:[%s306 + $0x20] sm:$0xf] %vm764, %v756
        %774 = vst.msk [vmem:[%s306 + $0x24] sm:$0xf] %vm764, %v757
        %775 = vst.msk [vmem:[%s306 + $0x28] sm:$0xf] %vm764, %v758
        %776 = vst.msk [vmem:[%s306 + $0x2c] sm:$0xf] %vm764, %v759
        %777 = vst.msk [vmem:[%s306 + $0x30] sm:$0xf] %vm764, %v760
        %778 = vst.msk [vmem:[%s306 + $0x34] sm:$0xf] %vm764, %v761
        %779 = vst.msk [vmem:[%s306 + $0x38] sm:$0xf] %vm764, %v762
        %780 = vst.msk [vmem:[%s306 + $0x3c] sm:$0xf] %vm764, %v763
      $region44: #{tpu_custom_call.1} parent=35 // pred_fallthru
        _
      %s781 = smul.u32 16, %s20
      %p782 = scmp.lt.s32.totalorder %s781, 255
      %s783 = scalar_select %p782, %s781, 255
      %p784 = scmp.lt.s32.totalorder %s21, 0
      %s785 = scalar_select %p784, %s21, 0
      %s786 = sadd.s32 %s785, %s783
      %s787 = smul.addr %s786, 4
      %s788 = scalar_lea.vmem %s4, %s787
      // Predicated region
      $region45: #{tpu_custom_call.1} parent=35 // pred_check
        %p789 = pneg %p162
      $region46: #{tpu_custom_call.1} parent=35 // pred_check_branch
        %791 = sbr.rel (%p789) target = $region48
      $region47: #{tpu_custom_call.1} parent=35 // pred_region
        %s792 = smul.u32 16, %s20
      $region48: #{tpu_custom_call.1} parent=35 // pred_fallthru
        _
    $region36: #{tpu_custom_call.1} parent=5 // pred_fallthru
      _
    %p793 = scmp.le.s32.totalorder 2, %s10
    // Predicated region
    $region49: #{tpu_custom_call.1} parent=5 // pred_check
      %p794 = pneg %p793
    $region50: #{tpu_custom_call.1} parent=5 // pred_check_branch
      %796 = sbr.rel (%p794) target = $region52
    $region51: #{tpu_custom_call.1} parent=5 // pred_region
      %s797 = ssub.s32 %s10, 2
      // Predicated region
      $region53: #{tpu_custom_call.1} parent=51 // pred_check
        %p798 = pneg %p168
      $region54: #{tpu_custom_call.1} parent=51 // pred_check_branch
        %800 = sbr.rel (%p798) target = $region56
      $region55: #{tpu_custom_call.1} parent=51 // pred_region
        %s801 = smul.u32 16, %s23
        %p802 = scmp.lt.s32.totalorder %s801, 255
        %s803 = scalar_select %p802, %s801, 255
        %p804 = scmp.lt.s32.totalorder %s24, 0
        %s805 = scalar_select %p804, %s24, 0
        %s806 = sadd.s32 %s805, %s803
        %s807 = smul.addr %s806, 4
        %s808 = scalar_lea.vmem %s4, %s807
      $region56: #{tpu_custom_call.1} parent=51 // pred_fallthru
        _
    $region52: #{tpu_custom_call.1} parent=5 // pred_fallthru
      _
  $region6: #{tpu_custom_call.1} parent=0 // loop_footer
    %s14 = sadd.s32 1, %s10
  $region7: #{tpu_custom_call.1} parent=0 // loop_footer_branch
    %9 = sbr.rel target = $region3
  $region8: #{tpu_custom_call.1} parent=0 // loop_exit
    _

</llo_original>
